<compile_context>
chip_gen: v5e
topology: v5e:2x2
jax: 0.10.0
libtpu: 0.0.40
codegen_flags: <defaults>
</compile_context>

<pallas_src>
import jax
import jax.numpy as jnp
from jax.experimental import pallas as pl
from jax.experimental.pallas import tpu as pltpu


def _where_kernel(x_ref, m_ref, o_ref):
    # x_ref: (BN, BH) x.dtype, m_ref: (1, BH) i8 broadcast over the batch tile.
    o_ref[...] = jnp.where(m_ref[...] != 0, x_ref[...], 0)


def _round_up(a: int, b: int) -> int:
    return ((a + b - 1) // b) * b


# Below this many bytes of input, a fused XLA where beats the pallas_call
# launch + single-grid-step fixed overhead.
_FAST_PATH_BYTES = 1 << 20


def where_net_forward(x, mask, *, force_pallas: bool = False):
    """y = where(mask, x, 0) with mask of shape (1, H) broadcast over batch."""
    N, H = x.shape
    assert mask.shape == (1, H), mask.shape

    if not force_pallas and N * H * x.dtype.itemsize < _FAST_PATH_BYTES:
        # Tiny inputs (the actual WhereNet shapes): pure overhead in Pallas.
        return jnp.where(mask, x, 0)

    # Tile sizes: sublane-aligned batch tile, lane-aligned hidden tile.
    BN = min(512, _round_up(N, 8))
    BH = min(2048, _round_up(H, 128))

    # x and out stay at their natural shapes; Pallas masks the ragged last
    # block (out-of-bounds lanes are never written back).  Only the tiny mask
    # row is padded so its lane extent is 128-aligned.
    Hm = _round_up(H, 128)
    mp = jnp.pad(mask.astype(jnp.int8), ((0, 0), (0, Hm - H)))

    # Hidden tiles outer (slow), batch tiles inner (fast): the mask block
    # index only changes on the outer axis, so it is not re-fetched per step.
    grid = (pl.cdiv(H, BH), pl.cdiv(N, BN))

    return pl.pallas_call(
        _where_kernel,
        out_shape=jax.ShapeDtypeStruct((N, H), x.dtype),
        grid=grid,
        in_specs=[
            pl.BlockSpec((BN, BH), lambda j, i: (i, j)),   # x tile
            pl.BlockSpec((1, BH), lambda j, i: (0, j)),    # shared mask row
        ],
        out_specs=pl.BlockSpec((BN, BH), lambda j, i: (i, j)),
        compiler_params=pltpu.CompilerParams(
            dimension_semantics=("parallel", "parallel"),
            vmem_limit_bytes=48 << 20,
        ),
    )(x, mp)


def reference_forward(x, mask):
    """Pure-JAX reference of WhereNet.forward."""
    return jnp.where(mask, x, 0)


if __name__ == "__main__":
    key = jax.random.PRNGKey(0)
    kx, km, kx2, km2 = jax.random.split(key, 4)

    # --- Model's real shapes: batch=2, n_hidden=32 ------------------------
    batch, n_hidden = 2, 32
    x = jax.random.normal(kx, (batch, n_hidden), jnp.float32)
    # Emulates `self.fc_tot = torch.rand(1, n_hidden) > 0.5` (fixed at init).
    mask = jax.random.uniform(km, (1, n_hidden)) > 0.5

    ref = reference_forward(x, mask)

    # Default path (small input -> fused XLA where fast path).
    out_fast = jax.block_until_ready(where_net_forward(x, mask))
    assert out_fast.shape == (batch, n_hidden)
    assert out_fast.dtype == x.dtype
    assert jnp.array_equal(out_fast, ref)

    # Force the Pallas kernel on the same input (exercises ragged blocks).
    out_pallas = jax.block_until_ready(where_net_forward(x, mask, force_pallas=True))
    assert out_pallas.shape == (batch, n_hidden)
    assert out_pallas.dtype == x.dtype
    assert jnp.array_equal(out_pallas, ref)

    # --- Ragged, non-aligned bf16 shape through the Pallas path -----------
    N2, H2 = 24, 300  # neither a multiple of (8, 128)
    x2 = jax.random.normal(kx2, (N2, H2), jnp.float32).astype(jnp.bfloat16)
    mask2 = jax.random.uniform(km2, (1, H2)) > 0.5
    out2 = jax.block_until_ready(where_net_forward(x2, mask2, force_pallas=True))
    ref2 = reference_forward(x2, mask2)
    assert out2.shape == (N2, H2)
    assert out2.dtype == jnp.bfloat16
    assert jnp.array_equal(out2, ref2)

    print("KERNEL_OK")
</pallas_src>

<mosaic_0001>
module attributes {stable_mosaic.version = 11 : i64} {
  func.func @_where_kernel(%arg0: i32, %arg1: i32, %arg2: memref<8x128xf32, #tpu.memory_space<vmem>>, %arg3: memref<1x128xi8, #tpu.memory_space<vmem>>, %arg4: memref<8x128xf32, #tpu.memory_space<vmem>>) attributes {dimension_semantics = [#tpu.dimension_semantics<parallel>, #tpu.dimension_semantics<parallel>], iteration_bounds = array<i64: 1, 1>, scalar_prefetch = 0 : i64, scratch_operands = 0 : i64, tpu.core_type = #tpu.core_type<tc>, window_params = [{transform_indices = @transform_0, window_bounds = array<i64: 8, 128>}, {transform_indices = @transform_1, window_bounds = array<i64: 1, 128>}, {transform_indices = @transform_2, window_bounds = array<i64: 8, 128>}]} {
    %c0 = arith.constant 0 : index
    %c0_0 = arith.constant 0 : index
    %0 = vector.load %arg3[%c0, %c0_0] : memref<1x128xi8, #tpu.memory_space<vmem>>, vector<1x128xi8>
    %c0_i8 = arith.constant 0 : i8
    %1 = vector.broadcast %c0_i8 : i8 to vector<1x128xi8>
    %2 = arith.cmpi ne, %0, %1 : vector<1x128xi8>
    %c0_1 = arith.constant 0 : index
    %c0_2 = arith.constant 0 : index
    %3 = vector.load %arg2[%c0_1, %c0_2] : memref<8x128xf32, #tpu.memory_space<vmem>>, vector<8x128xf32>
    %c0_i32 = arith.constant 0 : i32
    %4 = arith.sitofp %c0_i32 : i32 to f32
    %5 = vector.shape_cast %2 : vector<1x128xi1> to vector<1x128xi1>
    %6 = vector.broadcast %5 : vector<1x128xi1> to vector<8x128xi1>
    %7 = vector.broadcast %4 : f32 to vector<8x128xf32>
    %8 = arith.select %6, %3, %7 : vector<8x128xi1>, vector<8x128xf32>
    %c0_3 = arith.constant 0 : index
    %c0_4 = arith.constant 0 : index
    %9 = vector.load %arg4[%c0_3, %c0_4] : memref<8x128xf32, #tpu.memory_space<vmem>>, vector<8x128xf32>
    tpu.vector_store %arg4[%c0_3, %c0_4], %8 {strides = array<i32>} : memref<8x128xf32, #tpu.memory_space<vmem>>, vector<8x128xf32>,
    return
  }
  func.func @transform_0(%arg0: i32, %arg1: i32) -> (i32, i32) {
    %c0_i32 = arith.constant 0 : i32
    return %arg1, %arg0 : i32, i32
  }
  func.func @transform_1(%arg0: i32, %arg1: i32) -> (i32, i32) {
    %c0_i32 = arith.constant 0 : i32
    %c0_i32_0 = arith.constant 0 : i32
    return %c0_i32, %arg0 : i32, i32
  }
  func.func @transform_2(%arg0: i32, %arg1: i32) -> (i32, i32) {
    %c0_i32 = arith.constant 0 : i32
    return %arg1, %arg0 : i32, i32
  }
}

</mosaic_0001>

<llo_original>
// kernel: tpu_custom_call.1
$region0: #{tpu_custom_call.1}
  #allocation0 [shape = 'u32[]', space=smem, size = 0x4, offset = 0x4, fixed_abs, tag = 'smem constant byte address 0x4 - core index']
  #allocation1 [shape = 'u32[72,128]{1,0:T(1,128)}', space=vmem, size = 0x9000, scoped, tag = 'internal scratch']
  %s0 = inlined_call_operand.hbm [shape: f32[2,32], index: 0, kind: input, shape index: {}]
  %s1 = inlined_call_operand.hbm [shape: s8[1,128], index: 1, kind: input, shape index: {}]
  %s2 = inlined_call_operand.hbm [shape: f32[2,32], index: 2, kind: output, shape index: {}]
  %s3 = sld [smem:[#allocation0]]
  $region26: #{tpu_custom_call.1} parent=0
    _
  %s5 = ssub.s32 1, %s3
  %s6 = scalar_select 0, %s5, %s3
  $region1: #{tpu_custom_call.1} parent=0
    #allocation2 [shape = 'u8[4096]{0}', space=vmem, size = 0x1000, scoped, tag = 'input window, operand 0, single buffered']
    #allocation3 [shape = 's32[1]{0}', space=sflag, size = 0x4, scoped, tag = 'scoped memory for tpu_custom_call.1']
    #allocation4 [shape = 's32[1]{0}', space=sflag, size = 0x4, scoped, tag = 'scoped memory for tpu_custom_call.1']
    #allocation5 [shape = 'u8[512]{0}', space=vmem, size = 0x400, scoped, tag = 'input window, operand 1, single buffered']
    #allocation6 [shape = 's32[1]{0}', space=sflag, size = 0x4, scoped, tag = 'scoped memory for tpu_custom_call.1']
    #allocation7 [shape = 'u8[4096]{0}', space=vmem, size = 0x1000, scoped, tag = 'output window, operand 0, single buffered']
    %7 = vsyncpa [#allocation3], 0
    %8 = vsyncpa [#allocation6], 0
    %9 = vsyncpa [#allocation4], 0
    // Predicated region
    $region2: #{tpu_custom_call.1} parent=1 // pred_check
      _
    $region3: #{tpu_custom_call.1} parent=1 // pred_check_branch
      %11 = sbr.rel (0) target = $region5
    $region4: #{tpu_custom_call.1} parent=1 // pred_region
      %13 = vsyncadd [#allocation3], 96
      %s14 = sshll.u32 %s0, 4
      %s15 = int_to_ptr.hbm [resolvable:$true] %s14
      %s16 = sshll.u32 [#allocation2], 4
      %s17 = int_to_ptr.vmem [resolvable:$true] %s16
      %22 = dma.hbm_to_vmem [thread:$0]  %s15, 32, %s17, [#allocation3], 32, 32, 2
    $region5: #{tpu_custom_call.1} parent=1 // pred_fallthru
      _
    // Predicated region
    $region6: #{tpu_custom_call.1} parent=1 // pred_check
      _
    $region7: #{tpu_custom_call.1} parent=1 // pred_check_branch
      %24 = sbr.rel (0) target = $region9
    $region8: #{tpu_custom_call.1} parent=1 // pred_region
      %26 = vsyncadd [#allocation6], 0
      %s28 = sshll.u32 %s1, 4
      %s29 = int_to_ptr.hbm [resolvable:$true] %s28
      %s30 = sshll.u32 [#allocation5], 4
      %s31 = int_to_ptr.vmem [resolvable:$true] %s30
      %33 = dma.hbm_to_vmem [thread:$0]  %s29, 16, %s31, [#allocation6]
    $region9: #{tpu_custom_call.1} parent=1 // pred_fallthru
      _
    // Predicated region
    $region10: #{tpu_custom_call.1} parent=1 // pred_check
      _
    $region11: #{tpu_custom_call.1} parent=1 // pred_check_branch
      %35 = sbr.rel (0) target = $region13
    $region12: #{tpu_custom_call.1} parent=1 // pred_region
      %37 = dma.done [#allocation3], 128
    $region13: #{tpu_custom_call.1} parent=1 // pred_fallthru
      _
    // Predicated region
    $region14: #{tpu_custom_call.1} parent=1 // pred_check
      _
    $region15: #{tpu_custom_call.1} parent=1 // pred_check_branch
      %39 = sbr.rel (0) target = $region17
    $region16: #{tpu_custom_call.1} parent=1 // pred_region
      %41 = dma.done [#allocation6], 16
    $region17: #{tpu_custom_call.1} parent=1 // pred_fallthru
      _
    %v44 = vld [vmem:[#allocation5] sm:$0x1]
    %vm45 = vnez %v44
    %v46 = vld [vmem:[#allocation2] sm:$0xff]
    %v47 = vsel %vm45, 16843009, 0
    %v48 = vunpack.c.0.s8 %v47
    %vm49 = vcmp.ne.s32.totalorder %v48, 0
    %v50 = vsel %vm49, 1, 0
    %v51 = vperm.slane %v50, 0
    %vm52 = vcmp.eq.s32.totalorder %v51, 1
    %v53 = vsel %vm52, %v46, 0.0
    %54 = vst [vmem:[#allocation7] sm:$0xff] %v53
    // Predicated region
    $region18: #{tpu_custom_call.1} parent=1 // pred_check
      _
    $region19: #{tpu_custom_call.1} parent=1 // pred_check_branch
      %56 = sbr.rel (0) target = $region21
    $region20: #{tpu_custom_call.1} parent=1 // pred_region
      %58 = vsyncadd [#allocation4], 96
      %s59 = sshll.u32 [#allocation7], 4
      %s60 = int_to_ptr.vmem [resolvable:$true] %s59
      %s61 = sshll.u32 %s2, 4
      %s62 = int_to_ptr.hbm [resolvable:$true] %s61
      %67 = dma.vmem_to_hbm [thread:$0]  %s60, 32, %s62, [#allocation4], 32, 32, 2
    $region21: #{tpu_custom_call.1} parent=1 // pred_fallthru
      _
    // Predicated region
    $region22: #{tpu_custom_call.1} parent=1 // pred_check
      _
    $region23: #{tpu_custom_call.1} parent=1 // pred_check_branch
      %69 = sbr.rel (0) target = $region25
    $region24: #{tpu_custom_call.1} parent=1 // pred_region
      %71 = dma.done [#allocation4], 128
    $region25: #{tpu_custom_call.1} parent=1 // pred_fallthru
      _
    %72 = vsyncpa [#allocation3], 1
    %73 = vsyncpa [#allocation6], 1
    %74 = vsyncpa [#allocation4], 1

</llo_original>
